<compile_context>
chip_gen: v7x
topology: tpu7x:2x2x1
jax: 0.10.0
libtpu: 0.0.40
codegen_flags: <defaults>
</compile_context>

<pallas_src>
import functools

import jax
import jax.numpy as jnp
from jax.experimental import pallas as pl
from jax.experimental.pallas import tpu as pltpu

SUBLANE = 16            # batch-tile / hidden-dim granularity (covers f32 (8,128), bf16 (16,128))
MIN_TC_SPLIT_ROWS = 128  # force >= 2 batch tiles once each tile would still have this many rows


def _cdiv(a, b):
    return -(-a // b)


def _round_up(x, m):
    return _cdiv(x, m) * m


def _pad2(a, rows, cols):
    r, c = a.shape
    return jnp.pad(a, ((0, rows - r), (0, cols - c)))


# ---------------------------------------------------------------------------
# Capability / hardware queries (cached, outside the jitted path)
# ---------------------------------------------------------------------------
@functools.lru_cache(maxsize=None)
def _single_buffer_supported():
    """Explicit capability check: does this build accept pipeline_mode=pl.Buffered(1)?

    Compiles a trivial probe kernel once (cached). Failures of the *real* decoder kernel
    are never masked — only this probe is guarded."""
    if not hasattr(pl, "Buffered"):
        return False

    def probe_kernel(w_ref, o_ref):
        o_ref[...] = w_ref[...]

    try:
        fn = pl.pallas_call(
            probe_kernel,
            out_shape=jax.ShapeDtypeStruct((16, 128), jnp.float32),
            grid_spec=pltpu.PrefetchScalarGridSpec(
                num_scalar_prefetch=0,
                grid=(2,),
                in_specs=[pl.BlockSpec((8, 128), lambda i: (0, 0),
                                       pipeline_mode=pl.Buffered(1))],
                out_specs=pl.BlockSpec((8, 128), lambda i: (i, 0)),
            ),
        )
        jax.jit(fn).lower(jnp.zeros((8, 128), jnp.float32)).compile()
        return True
    except Exception:  # narrow: probe only; real kernel errors surface normally.
        return False


@functools.lru_cache(maxsize=None)
def _vmem_cap_bytes():
    """Generation-aware VMEM request cap: 85% of physical per-TC VMEM."""
    try:
        physical = int(pltpu.get_tpu_info().vmem_capacity_bytes)
    except Exception:
        physical = 64 * 2 ** 20  # conservative fallback = v7x per-TC VMEM
    return int(0.85 * physical)


# ---------------------------------------------------------------------------
# Kernel
# ---------------------------------------------------------------------------
def decoder_kernel(x_ref, w0_ref, b0_ref, w1_ref, b1_ref, w2_ref, b2_ref,
                   wo_ref, bo_ref, out_ref):
    cdt = w0_ref.dtype                      # MXU input dtype; accumulation is always f32.
    x = x_ref[...].astype(cdt)              # in-kernel cast: x streams from HBM at native dtype

    # input_layer: Linear(in_dim, hidden) + ReLU
    h = jnp.dot(x, w0_ref[...], preferred_element_type=jnp.float32) + b0_ref[...]
    h = jnp.maximum(h, 0.0)

    # mlp layer 1: ResLinear(hidden, hidden) + ReLU   (bias / residual adds stay f32)
    h = jnp.dot(h.astype(cdt), w1_ref[...],
                preferred_element_type=jnp.float32) + b1_ref[...] + h
    h = jnp.maximum(h, 0.0)

    # mlp layer 2: ResLinear(hidden, hidden) + ReLU
    h = jnp.dot(h.astype(cdt), w2_ref[...],
                preferred_element_type=jnp.float32) + b2_ref[...] + h
    h = jnp.maximum(h, 0.0)

    # out_layer: Linear(hidden, out_dim)
    out_ref[...] = (jnp.dot(h.astype(cdt), wo_ref[...],
                            preferred_element_type=jnp.float32)
                    + bo_ref[...]).astype(out_ref.dtype)


# ---------------------------------------------------------------------------
# One-time parameter preparation (hoisted out of the per-call path)
# ---------------------------------------------------------------------------
def prepare_params(params, compute_dtype=jnp.bfloat16):
    """Pad the hidden dim to a sublane multiple and cast weights to the MXU compute dtype.

    Zero padding is semantics-preserving: padded hidden lanes see zero weight columns and
    zero bias, stay zero through ReLU + residual, and multiply zero rows of the next weight.
    """
    (w0, b0), (w1, b1), (w2, b2), (wo, bo) = params
    in_dim, hidden = w0.shape
    out_dim = wo.shape[1]
    hid_p = _round_up(hidden, SUBLANE)
    cdt = jnp.dtype(compute_dtype)
    return (
        _pad2(w0, in_dim, hid_p).astype(cdt),
        _pad2(b0.reshape(1, -1), 1, hid_p).astype(jnp.float32),
        _pad2(w1, hid_p, hid_p).astype(cdt),
        _pad2(b1.reshape(1, -1), 1, hid_p).astype(jnp.float32),
        _pad2(w2, hid_p, hid_p).astype(cdt),
        _pad2(b2.reshape(1, -1), 1, hid_p).astype(jnp.float32),
        _pad2(wo, hid_p, out_dim).astype(cdt),
        bo.reshape(1, -1).astype(jnp.float32),
    )


# ---------------------------------------------------------------------------
# Forward
# ---------------------------------------------------------------------------
@functools.partial(jax.jit,
                   static_argnames=("batch_tile", "single_buffer", "vmem_cap_bytes"))
def _decoder_forward_impl(x, prepped, *, batch_tile, single_buffer, vmem_cap_bytes):
    w0p, b0p, w1p, b1p, w2p, b2p, wop, bop = prepped
    B, in_dim = x.shape
    assert w0p.shape[0] == in_dim, "x feature dim must match prepared W0"
    hid_p = w0p.shape[1]
    out_dim = wop.shape[1]
    itemsize = jnp.dtype(w0p.dtype).itemsize

    # --- balanced batch tiling: padding waste < SUBLANE rows; >= 2 tiles for large B so the
    # "parallel" grid axis can occupy both v7x TensorCores.
    n_tiles = max(1, _cdiv(B, batch_tile))
    if B >= 2 * MIN_TC_SPLIT_ROWS:
        n_tiles = max(n_tiles, 2)
    bt = _round_up(_cdiv(B, n_tiles), SUBLANE)
    n_tiles = _cdiv(B, bt)
    B_p = n_tiles * bt

    xp = jnp.pad(x, ((0, B_p - B), (0, 0))) if B_p != B else x

    batch_map = lambda i: (i, 0)
    rep_map = lambda i: (0, 0)
    if single_buffer:
        # Weights/biases never change block index across the grid: single-buffer them.
        wspec = lambda shape: pl.BlockSpec(shape, rep_map, pipeline_mode=pl.Buffered(1))
        wbuf = 1
    else:
        wspec = lambda shape: pl.BlockSpec(shape, rep_map)
        wbuf = 2

    # --- explicit VMEM budget with a generation-aware cap.
    weight_bytes = (in_dim * hid_p + 2 * hid_p * hid_p + hid_p * out_dim) * itemsize
    bias_bytes = (3 * hid_p + out_dim) * 4
    act_bytes = 2 * bt * (in_dim + out_dim) * 4           # double-buffered x / out f32 tiles
    scratch_bytes = 4 * bt * hid_p * 4                    # f32 intermediates + headroom
    est = wbuf * (weight_bytes + bias_bytes) + act_bytes + scratch_bytes
    vmem_limit = int(min(max(2 * est, 32 * 2 ** 20), vmem_cap_bytes))
    # TODO(synk): if resident weights alone exceed vmem_cap_bytes (very large hidden dims),
    # add a hidden-dim grid axis with a K-accumulator instead of full weight residency.

    out = pl.pallas_call(
        decoder_kernel,
        out_shape=jax.ShapeDtypeStruct((B_p, out_dim), jnp.float32),
        grid_spec=pltpu.PrefetchScalarGridSpec(
            num_scalar_prefetch=0,
            grid=(n_tiles,),
            in_specs=[
                pl.BlockSpec((bt, in_dim), batch_map),   # x tile (native feature width)
                wspec((in_dim, hid_p)),                  # W0
                wspec((1, hid_p)),                       # b0
                wspec((hid_p, hid_p)),                   # W1
                wspec((1, hid_p)),                       # b1
                wspec((hid_p, hid_p)),                   # W2
                wspec((1, hid_p)),                       # b2
                wspec((hid_p, out_dim)),                 # Wo
                wspec((1, out_dim)),                     # bo
            ],
            out_specs=pl.BlockSpec((bt, out_dim), batch_map),
        ),
        compiler_params=pltpu.CompilerParams(
            dimension_semantics=("parallel",),
            vmem_limit_bytes=vmem_limit),
    )(xp, w0p, b0p, w1p, b1p, w2p, b2p, wop, bop)

    return out[:B] if B_p != B else out


def decoder_forward(x, prepped_params, *, batch_tile=512):
    """Fused Decoder forward. `prepped_params` comes from prepare_params() (call it once)."""
    return _decoder_forward_impl(
        x, prepped_params,
        batch_tile=int(batch_tile),
        single_buffer=_single_buffer_supported(),
        vmem_cap_bytes=_vmem_cap_bytes())


# ---------------------------------------------------------------------------
# Reference / init helpers
# ---------------------------------------------------------------------------
def init_linear(key, fan_in, fan_out):
    """PyTorch-style Linear init: U(-1/sqrt(fan_in), 1/sqrt(fan_in)).
    W returned pre-transposed as (fan_in, fan_out); b as (1, fan_out)."""
    kw, kb = jax.random.split(key)
    bound = 1.0 / jnp.sqrt(fan_in)
    w = jax.random.uniform(kw, (fan_in, fan_out), jnp.float32, -bound, bound)
    b = jax.random.uniform(kb, (1, fan_out), jnp.float32, -bound, bound)
    return w, b


def reference_forward(x, params):
    (w0, b0), (w1, b1), (w2, b2), (wo, bo) = params
    h = jnp.maximum(x @ w0 + b0, 0.0)
    h = jnp.maximum(h @ w1 + b1 + h, 0.0)
    h = jnp.maximum(h @ w2 + b2 + h, 0.0)
    return h @ wo + bo


if __name__ == "__main__":
    # Small shapes consistent with Decoder(in_dim=16, hidden_dim=32, out_dim=8,
    # num_hidden_layers=3); batch = 16.
    B, in_dim, hidden, out_dim = 16, 16, 32, 8

    key = jax.random.PRNGKey(0)
    kx, k0, k1, k2, ko = jax.random.split(key, 5)

    x = jax.random.normal(kx, (B, in_dim), jnp.float32)
    params = (
        init_linear(k0, in_dim, hidden),    # input_layer Linear
        init_linear(k1, hidden, hidden),    # mlp ResLinear 1
        init_linear(k2, hidden, hidden),    # mlp ResLinear 2
        init_linear(ko, hidden, out_dim),   # out_layer Linear
    )

    y_ref = reference_forward(x, params)

    # f32 MXU path: matches the reference to float precision.
    prepped_f32 = prepare_params(params, compute_dtype=jnp.float32)
    y = jax.block_until_ready(decoder_forward(x, prepped_f32))
    assert y.shape == (B, out_dim)
    assert jnp.allclose(y, y_ref, atol=1e-5, rtol=1e-5), "f32 mismatch vs reference"

    # Ragged batch (B not a multiple of the sublane tile) exercises the batch-padding path.
    y_rag = jax.block_until_ready(decoder_forward(x[:10], prepped_f32))
    assert y_rag.shape == (10, out_dim)
    assert jnp.allclose(y_rag, y_ref[:10], atol=1e-5, rtol=1e-5), "ragged mismatch"

    # Default bf16 MXU path (f32 accumulation; bias/residual f32) — fast path on v5e/v6e/v7x.
    prepped_bf16 = prepare_params(params)   # compute_dtype defaults to bf16
    y_bf16 = jax.block_until_ready(decoder_forward(x, prepped_bf16))
    rel = jnp.linalg.norm(y_bf16.astype(jnp.float32) - y_ref) / jnp.linalg.norm(y_ref)
    assert rel < 5e-2, f"bf16 relative error too large: {rel}"

    print("KERNEL_OK")
</pallas_src>

<mosaic_0001>
module attributes {stable_mosaic.version = 11 : i64} {
  func.func @decoder_kernel(%arg0: i32, %arg1: memref<16x16xf32, #tpu.memory_space<vmem>>, %arg2: memref<16x32xf32, #tpu.memory_space<vmem>>, %arg3: memref<1x32xf32, #tpu.memory_space<vmem>>, %arg4: memref<32x32xf32, #tpu.memory_space<vmem>>, %arg5: memref<1x32xf32, #tpu.memory_space<vmem>>, %arg6: memref<32x32xf32, #tpu.memory_space<vmem>>, %arg7: memref<1x32xf32, #tpu.memory_space<vmem>>, %arg8: memref<32x8xf32, #tpu.memory_space<vmem>>, %arg9: memref<1x8xf32, #tpu.memory_space<vmem>>, %arg10: memref<16x8xf32, #tpu.memory_space<vmem>>) attributes {dimension_semantics = [#tpu.dimension_semantics<parallel>], iteration_bounds = array<i64: 1>, scalar_prefetch = 0 : i64, scratch_operands = 0 : i64, tpu.core_type = #tpu.core_type<tc>, window_params = [{transform_indices = @transform_0, window_bounds = array<i64: 16, 16>}, {pipeline_mode = #tpu.pipeline_mode<synchronous>, transform_indices = @transform_1, window_bounds = array<i64: 16, 32>}, {pipeline_mode = #tpu.pipeline_mode<synchronous>, transform_indices = @transform_2, window_bounds = array<i64: 1, 32>}, {pipeline_mode = #tpu.pipeline_mode<synchronous>, transform_indices = @transform_3, window_bounds = array<i64: 32, 32>}, {pipeline_mode = #tpu.pipeline_mode<synchronous>, transform_indices = @transform_4, window_bounds = array<i64: 1, 32>}, {pipeline_mode = #tpu.pipeline_mode<synchronous>, transform_indices = @transform_5, window_bounds = array<i64: 32, 32>}, {pipeline_mode = #tpu.pipeline_mode<synchronous>, transform_indices = @transform_6, window_bounds = array<i64: 1, 32>}, {pipeline_mode = #tpu.pipeline_mode<synchronous>, transform_indices = @transform_7, window_bounds = array<i64: 32, 8>}, {pipeline_mode = #tpu.pipeline_mode<synchronous>, transform_indices = @transform_8, window_bounds = array<i64: 1, 8>}, {transform_indices = @transform_9, window_bounds = array<i64: 16, 8>}]} {
    %c0 = arith.constant 0 : index
    %c0_0 = arith.constant 0 : index
    %0 = vector.load %arg1[%c0, %c0_0] : memref<16x16xf32, #tpu.memory_space<vmem>>, vector<16x16xf32>
    %c0_1 = arith.constant 0 : index
    %c0_2 = arith.constant 0 : index
    %1 = vector.load %arg2[%c0_1, %c0_2] : memref<16x32xf32, #tpu.memory_space<vmem>>, vector<16x32xf32>
    %cst = arith.constant dense<0.000000e+00> : vector<16x32xf32>
    %2 = tpu.matmul %0, %1, %cst {dimension_numbers = #tpu.dot_dimension_numbers<[1], [0], [0], [1], [0, 0, 1, 1], [], []>} : vector<16x16xf32>, vector<16x32xf32>, vector<16x32xf32> -> vector<16x32xf32>
    %c0_3 = arith.constant 0 : index
    %c0_4 = arith.constant 0 : index
    %3 = vector.load %arg3[%c0_3, %c0_4] : memref<1x32xf32, #tpu.memory_space<vmem>>, vector<1x32xf32>
    %4 = vector.broadcast %3 : vector<1x32xf32> to vector<16x32xf32>
    %5 = arith.addf %2, %4 : vector<16x32xf32>
    %cst_5 = arith.constant 0.000000e+00 : f32
    %6 = vector.broadcast %cst_5 : f32 to vector<16x32xf32>
    %7 = arith.maximumf %5, %6 : vector<16x32xf32>
    %c0_6 = arith.constant 0 : index
    %c0_7 = arith.constant 0 : index
    %8 = vector.load %arg4[%c0_6, %c0_7] : memref<32x32xf32, #tpu.memory_space<vmem>>, vector<32x32xf32>
    %cst_8 = arith.constant dense<0.000000e+00> : vector<16x32xf32>
    %9 = tpu.matmul %7, %8, %cst_8 {dimension_numbers = #tpu.dot_dimension_numbers<[1], [0], [0], [1], [0, 0, 1, 1], [], []>} : vector<16x32xf32>, vector<32x32xf32>, vector<16x32xf32> -> vector<16x32xf32>
    %c0_9 = arith.constant 0 : index
    %c0_10 = arith.constant 0 : index
    %10 = vector.load %arg5[%c0_9, %c0_10] : memref<1x32xf32, #tpu.memory_space<vmem>>, vector<1x32xf32>
    %11 = vector.broadcast %10 : vector<1x32xf32> to vector<16x32xf32>
    %12 = arith.addf %9, %11 : vector<16x32xf32>
    %13 = arith.addf %12, %7 : vector<16x32xf32>
    %cst_11 = arith.constant 0.000000e+00 : f32
    %14 = vector.broadcast %cst_11 : f32 to vector<16x32xf32>
    %15 = arith.maximumf %13, %14 : vector<16x32xf32>
    %c0_12 = arith.constant 0 : index
    %c0_13 = arith.constant 0 : index
    %16 = vector.load %arg6[%c0_12, %c0_13] : memref<32x32xf32, #tpu.memory_space<vmem>>, vector<32x32xf32>
    %cst_14 = arith.constant dense<0.000000e+00> : vector<16x32xf32>
    %17 = tpu.matmul %15, %16, %cst_14 {dimension_numbers = #tpu.dot_dimension_numbers<[1], [0], [0], [1], [0, 0, 1, 1], [], []>} : vector<16x32xf32>, vector<32x32xf32>, vector<16x32xf32> -> vector<16x32xf32>
    %c0_15 = arith.constant 0 : index
    %c0_16 = arith.constant 0 : index
    %18 = vector.load %arg7[%c0_15, %c0_16] : memref<1x32xf32, #tpu.memory_space<vmem>>, vector<1x32xf32>
    %19 = vector.broadcast %18 : vector<1x32xf32> to vector<16x32xf32>
    %20 = arith.addf %17, %19 : vector<16x32xf32>
    %21 = arith.addf %20, %15 : vector<16x32xf32>
    %cst_17 = arith.constant 0.000000e+00 : f32
    %22 = vector.broadcast %cst_17 : f32 to vector<16x32xf32>
    %23 = arith.maximumf %21, %22 : vector<16x32xf32>
    %c0_18 = arith.constant 0 : index
    %c0_19 = arith.constant 0 : index
    %24 = vector.load %arg8[%c0_18, %c0_19] : memref<32x8xf32, #tpu.memory_space<vmem>>, vector<32x8xf32>
    %cst_20 = arith.constant dense<0.000000e+00> : vector<16x8xf32>
    %25 = tpu.matmul %23, %24, %cst_20 {dimension_numbers = #tpu.dot_dimension_numbers<[1], [0], [0], [1], [0, 0, 1, 1], [], []>} : vector<16x32xf32>, vector<32x8xf32>, vector<16x8xf32> -> vector<16x8xf32>
    %c0_21 = arith.constant 0 : index
    %c0_22 = arith.constant 0 : index
    %26 = vector.load %arg9[%c0_21, %c0_22] : memref<1x8xf32, #tpu.memory_space<vmem>>, vector<1x8xf32>
    %27 = vector.broadcast %26 : vector<1x8xf32> to vector<16x8xf32>
    %28 = arith.addf %25, %27 : vector<16x8xf32>
    %c0_23 = arith.constant 0 : index
    %c0_24 = arith.constant 0 : index
    %29 = vector.load %arg10[%c0_23, %c0_24] : memref<16x8xf32, #tpu.memory_space<vmem>>, vector<16x8xf32>
    tpu.vector_store %arg10[%c0_23, %c0_24], %28 {strides = array<i32>} : memref<16x8xf32, #tpu.memory_space<vmem>>, vector<16x8xf32>,
    return
  }
  func.func @transform_0(%arg0: i32) -> (i32, i32) {
    %c0_i32 = arith.constant 0 : i32
    %c0_i32_0 = arith.constant 0 : i32
    return %arg0, %c0_i32 : i32, i32
  }
  func.func @transform_1(%arg0: i32) -> (i32, i32) {
    %c0_i32 = arith.constant 0 : i32
    %c0_i32_0 = arith.constant 0 : i32
    %c0_i32_1 = arith.constant 0 : i32
    return %c0_i32, %c0_i32_0 : i32, i32
  }
  func.func @transform_2(%arg0: i32) -> (i32, i32) {
    %c0_i32 = arith.constant 0 : i32
    %c0_i32_0 = arith.constant 0 : i32
    %c0_i32_1 = arith.constant 0 : i32
    return %c0_i32, %c0_i32_0 : i32, i32
  }
  func.func @transform_3(%arg0: i32) -> (i32, i32) {
    %c0_i32 = arith.constant 0 : i32
    %c0_i32_0 = arith.constant 0 : i32
    %c0_i32_1 = arith.constant 0 : i32
    return %c0_i32, %c0_i32_0 : i32, i32
  }
  func.func @transform_4(%arg0: i32) -> (i32, i32) {
    %c0_i32 = arith.constant 0 : i32
    %c0_i32_0 = arith.constant 0 : i32
    %c0_i32_1 = arith.constant 0 : i32
    return %c0_i32, %c0_i32_0 : i32, i32
  }
  func.func @transform_5(%arg0: i32) -> (i32, i32) {
    %c0_i32 = arith.constant 0 : i32
    %c0_i32_0 = arith.constant 0 : i32
    %c0_i32_1 = arith.constant 0 : i32
    return %c0_i32, %c0_i32_0 : i32, i32
  }
  func.func @transform_6(%arg0: i32) -> (i32, i32) {
    %c0_i32 = arith.constant 0 : i32
    %c0_i32_0 = arith.constant 0 : i32
    %c0_i32_1 = arith.constant 0 : i32
    return %c0_i32, %c0_i32_0 : i32, i32
  }
  func.func @transform_7(%arg0: i32) -> (i32, i32) {
    %c0_i32 = arith.constant 0 : i32
    %c0_i32_0 = arith.constant 0 : i32
    %c0_i32_1 = arith.constant 0 : i32
    return %c0_i32, %c0_i32_0 : i32, i32
  }
  func.func @transform_8(%arg0: i32) -> (i32, i32) {
    %c0_i32 = arith.constant 0 : i32
    %c0_i32_0 = arith.constant 0 : i32
    %c0_i32_1 = arith.constant 0 : i32
    return %c0_i32, %c0_i32_0 : i32, i32
  }
  func.func @transform_9(%arg0: i32) -> (i32, i32) {
    %c0_i32 = arith.constant 0 : i32
    %c0_i32_0 = arith.constant 0 : i32
    return %arg0, %c0_i32 : i32, i32
  }
}

</mosaic_0001>

<llo_original>
// kernel: _decoder_forward_impl.1
$region0: #{_decoder_forward_impl.1}
  #allocation0 [shape = 'u32[]', space=smem, size = 0x4, offset = 0x4, fixed_abs, tag = 'smem constant byte address 0x4 - core index']
  #allocation1 [shape = 'u32[144,128]{1,0:T(1,128)}', space=vmem, size = 0x12000, scoped, tag = 'internal scratch']
  %s0 = inlined_call_operand.vmem [shape: f32[16,16], index: 0, kind: input, shape index: {}]
  %s1 = inlined_call_operand.hbm [shape: f32[16,32], index: 1, kind: input, shape index: {}]
  %s2 = inlined_call_operand.vmem [shape: f32[1,32], index: 2, kind: input, shape index: {}]
  %s3 = inlined_call_operand.vmem [shape: f32[32,32], index: 3, kind: input, shape index: {}]
  %s4 = inlined_call_operand.vmem [shape: f32[1,32], index: 4, kind: input, shape index: {}]
  %s5 = inlined_call_operand.hbm [shape: f32[32,32], index: 5, kind: input, shape index: {}]
  %s6 = inlined_call_operand.vmem [shape: f32[1,32], index: 6, kind: input, shape index: {}]
  %s7 = inlined_call_operand.vmem [shape: f32[32,8], index: 7, kind: input, shape index: {}]
  %s8 = inlined_call_operand.vmem [shape: f32[1,8], index: 8, kind: input, shape index: {}]
  %s9 = inlined_call_operand.vmem [shape: f32[16,8], index: 9, kind: output, shape index: {}]
  %s10 = sld [smem:[#allocation0]]
  $region54: #{_decoder_forward_impl.1} parent=0
    _
  %s12 = ssub.s32 1, %s10
  %s13 = scalar_select 0, %s12, %s10
  $region1: #{_decoder_forward_impl.1} parent=0
    #allocation2 [shape = 'u8[8192]{0}', space=vmem, size = 0x2000, scoped, tag = 'input window, operand 1, single buffered']
    #allocation3 [shape = 's32[1]{0}', space=sflag, size = 0x4, scoped, tag = 'scoped memory for _decoder_forward_impl.1']
    #allocation4 [shape = 'u8[16384]{0}', space=vmem, size = 0x4000, scoped, tag = 'input window, operand 5, single buffered']
    #allocation5 [shape = 's32[1]{0}', space=sflag, size = 0x4, scoped, tag = 'scoped memory for _decoder_forward_impl.1']
    %14 = vsyncpa [#allocation3], 0
    %15 = vsyncpa [#allocation5], 0
    // Predicated region
    $region2: #{_decoder_forward_impl.1} parent=1 // pred_check
      _
    $region3: #{_decoder_forward_impl.1} parent=1 // pred_check_branch
      %17 = sbr.rel (0) target = $region5
    $region4: #{_decoder_forward_impl.1} parent=1 // pred_region
      _
    $region5: #{_decoder_forward_impl.1} parent=1 // pred_fallthru
      _
    // Predicated region
    $region6: #{_decoder_forward_impl.1} parent=1 // pred_check
      _
    $region7: #{_decoder_forward_impl.1} parent=1 // pred_check_branch
      %19 = sbr.rel (0) target = $region9
    $region8: #{_decoder_forward_impl.1} parent=1 // pred_region
      %s21 = ssub.s32 256, 256
      %22 = vsyncadd [#allocation3], %s21
      %s23 = sshll.u32 [#allocation2], 4
      %s24 = int_to_ptr.vmem [resolvable:$true] %s23
      %29 = dma.hbm_to_vmem [thread:$0]  %s1, 256, %s24, [#allocation3], 128, 128, 8
    $region9: #{_decoder_forward_impl.1} parent=1 // pred_fallthru
      _
    // Predicated region
    $region10: #{_decoder_forward_impl.1} parent=1 // pred_check
      _
    $region11: #{_decoder_forward_impl.1} parent=1 // pred_check_branch
      %31 = sbr.rel (0) target = $region13
    $region12: #{_decoder_forward_impl.1} parent=1 // pred_region
      _
    $region13: #{_decoder_forward_impl.1} parent=1 // pred_fallthru
      _
    // Predicated region
    $region14: #{_decoder_forward_impl.1} parent=1 // pred_check
      _
    $region15: #{_decoder_forward_impl.1} parent=1 // pred_check_branch
      %33 = sbr.rel (0) target = $region17
    $region16: #{_decoder_forward_impl.1} parent=1 // pred_region
      _
    $region17: #{_decoder_forward_impl.1} parent=1 // pred_fallthru
      _
    // Predicated region
    $region18: #{_decoder_forward_impl.1} parent=1 // pred_check
      _
    $region19: #{_decoder_forward_impl.1} parent=1 // pred_check_branch
      %35 = sbr.rel (0) target = $region21
    $region20: #{_decoder_forward_impl.1} parent=1 // pred_region
      _
    $region21: #{_decoder_forward_impl.1} parent=1 // pred_fallthru
      _
    // Predicated region
    $region22: #{_decoder_forward_impl.1} parent=1 // pred_check
      _
    $region23: #{_decoder_forward_impl.1} parent=1 // pred_check_branch
      %37 = sbr.rel (0) target = $region25
    $region24: #{_decoder_forward_impl.1} parent=1 // pred_region
      %s39 = ssub.s32 512, 512
      %40 = vsyncadd [#allocation5], %s39
      %s41 = sshll.u32 [#allocation4], 4
      %s42 = int_to_ptr.vmem [resolvable:$true] %s41
      %47 = dma.hbm_to_vmem [thread:$0]  %s5, 512, %s42, [#allocation5], 128, 128, 8
    $region25: #{_decoder_forward_impl.1} parent=1 // pred_fallthru
      _
    // Predicated region
    $region26: #{_decoder_forward_impl.1} parent=1 // pred_check
      _
    $region27: #{_decoder_forward_impl.1} parent=1 // pred_check_branch
      %49 = sbr.rel (0) target = $region29
    $region28: #{_decoder_forward_impl.1} parent=1 // pred_region
      _
    $region29: #{_decoder_forward_impl.1} parent=1 // pred_fallthru
      _
    // Predicated region
    $region30: #{_decoder_forward_impl.1} parent=1 // pred_check
      _
    $region31: #{_decoder_forward_impl.1} parent=1 // pred_check_branch
      %51 = sbr.rel (0) target = $region33
    $region32: #{_decoder_forward_impl.1} parent=1 // pred_region
      _
    $region33: #{_decoder_forward_impl.1} parent=1 // pred_fallthru
      _
    // Predicated region
    $region34: #{_decoder_forward_impl.1} parent=1 // pred_check
      _
    $region35: #{_decoder_forward_impl.1} parent=1 // pred_check_branch
      %53 = sbr.rel (0) target = $region37
    $region36: #{_decoder_forward_impl.1} parent=1 // pred_region
      _
    $region37: #{_decoder_forward_impl.1} parent=1 // pred_fallthru
      _
    // Predicated region
    $region38: #{_decoder_forward_impl.1} parent=1 // pred_check
      _
    $region39: #{_decoder_forward_impl.1} parent=1 // pred_check_branch
      %55 = sbr.rel (0) target = $region41
    $region40: #{_decoder_forward_impl.1} parent=1 // pred_region
      %56 = dma.done [#allocation3], 256
    $region41: #{_decoder_forward_impl.1} parent=1 // pred_fallthru
      _
    // Predicated region
    $region42: #{_decoder_forward_impl.1} parent=1 // pred_check
      _
    $region43: #{_decoder_forward_impl.1} parent=1 // pred_check_branch
      %58 = sbr.rel (0) target = $region45
    $region44: #{_decoder_forward_impl.1} parent=1 // pred_region
      %59 = dma.done [#allocation5], 512
    $region45: #{_decoder_forward_impl.1} parent=1 // pred_fallthru
      _
    %v60 = vld [vmem:[%s0] sm:$0xff]
    %v61 = vld [vmem:[%s0 + $0x8] sm:$0xff]
    %v62 = vld [vmem:[#allocation2] sm:$0xff]
    %v63 = vld [vmem:[#allocation2 + $0x8] sm:$0xff]
    %v64 = vld [vmem:[%s2] sm:$0x1]
    %v66 = vlaneseq
    %v67 = vshrl.u32 %v66, 7
    %v68 = vsub.s32 0, %v67
    %v69 = vrot.slane %v64, %v68
    %vm71 = vcmask 130048
    %v73 = vsel %vm71, %v60, 0
    %v76 = vsel %vm71, %v61, 0
    %78 = vmatprep.subr.mxu0 0.0
    %79 = vmatpush1.msra.mxu0 %v62
    %80 = vmatprep.subr.mxu0 0.0
    %81 = vmatpush1.msra.mxu0 %v63
    %82 = vmatprep.subr.mxu0 0.0
    %83 = vmatpush1.msra.mxu0 0.0
    %84 = vmatprep.subr.mxu0 0.0
    %85 = vmatpush1.msra.mxu0 0.0
    %86 = vmatprep.subr.mxu0 0.0
    %87 = vmatpush1.msra.mxu0 0.0
    %88 = vmatprep.subr.mxu0 0.0
    %89 = vmatpush1.msra.mxu0 0.0
    %90 = vmatprep.subr.mxu0 0.0
    %91 = vmatpush1.msra.mxu0 0.0
    %92 = vmatprep.subr.mxu0 0.0
    %93 = vmatpush1.msra.mxu0 0.0
    %94 = vmatprep.subr.mxu0 0.0
    %95 = vmatpush1.msra.mxu0 0.0
    %96 = vmatprep.subr.mxu0 0.0
    %97 = vmatpush1.msra.mxu0 0.0
    %98 = vmatprep.subr.mxu0 0.0
    %99 = vmatpush1.msra.mxu0 0.0
    %100 = vmatprep.subr.mxu0 0.0
    %101 = vmatpush1.msra.mxu0 0.0
    %102 = vmatprep.subr.mxu0 0.0
    %103 = vmatpush1.msra.mxu0 0.0
    %104 = vmatprep.subr.mxu0 0.0
    %105 = vmatpush1.msra.mxu0 0.0
    %106 = vmatprep.subr.mxu0 0.0
    %107 = vmatpush1.msra.mxu0 0.0
    %108 = vmatprep.subr.mxu0 0.0
    %109 = vmatpush1.msra.mxu0 0.0
    %110 = vmatprep.subr.mxu0 0.0
    %111 = vmatpush1.msra.mxu0 0.0
    %112 = vmatprep.subr.mxu0 0.0
    %113 = vmatpush1.msra.mxu0 0.0
    %114 = vmatprep.subr.mxu0 0.0
    %115 = vmatpush1.msra.mxu0 0.0
    %116 = vmatprep.subr.mxu0 0.0
    %117 = vmatpush1.msra.mxu0 0.0
    %118 = vmatprep.subr.mxu0 0.0
    %119 = vmatpush1.msra.mxu0 0.0
    %120 = vmatprep.subr.mxu0 0.0
    %121 = vmatpush1.msra.mxu0 0.0
    %122 = vmatprep.subr.mxu0 0.0
    %123 = vmatpush1.msra.mxu0 0.0
    %124 = vmatprep.subr.mxu0 0.0
    %125 = vmatpush1.msra.mxu0 0.0
    %126 = vmatprep.subr.mxu0 0.0
    %127 = vmatpush1.msra.mxu0 0.0
    %128 = vmatprep.subr.mxu0 0.0
    %129 = vmatpush1.msra.mxu0 0.0
    %130 = vmatprep.subr.mxu0 0.0
    %131 = vmatpush1.msra.mxu0 0.0
    %132 = vmatprep.subr.mxu0 0.0
    %133 = vmatpush1.msra.mxu0 0.0
    %134 = vmatprep.subr.mxu0 0.0
    %135 = vmatpush1.msra.mxu0 0.0
    %136 = vmatprep.subr.mxu0 0.0
    %137 = vmatpush1.msra.mxu0 0.0
    %138 = vmatprep.subr.mxu0 0.0
    %139 = vmatpush1.msra.mxu0 0.0
    %140 = vmatprep.subr.mxu0 0.0
    %141 = vmatpush1.msra.mxu0 0.0
    %142 = vmatprep.mubr.f32.mxu0 0.0
    %143 = vmatmul.mubr.f32.gmra.mrb[0].mxu0 %v73
    %v144 = vpop.f32.mrb[0].mxu0
    %v145 = vadd.f32 %v69, %v144
    %v146 = vpop.f32.mrb[0].mxu0
    %147 = vmatprep.mubr.f32.mxu0 0.0
    %148 = vmatmul.mubr.f32.gmra.mrb[0].mxu0 %v76
    %v149 = vpop.f32.mrb[0].mxu0
    %v150 = vadd.f32 %v69, %v149
    %v151 = vpop.f32.mrb[0].mxu0
    %152 = vdwg.mxu0
    %v153 = vmax.f32 %v145, 0.0
    %v154 = vmax.f32 %v150, 0.0
    %v155 = vld [vmem:[%s3] sm:$0xff]
    %v156 = vld [vmem:[%s3 + $0x8] sm:$0xff]
    %v157 = vld [vmem:[%s3 + $0x10] sm:$0xff]
    %v158 = vld [vmem:[%s3 + $0x18] sm:$0xff]
    %v159 = vld [vmem:[%s4] sm:$0x1]
    %v161 = vlaneseq
    %v162 = vshrl.u32 %v161, 7
    %v163 = vsub.s32 0, %v162
    %v164 = vrot.slane %v159, %v163
    %vm166 = vcmask 261120
    %v168 = vsel %vm166, %v153, 0
    %v171 = vsel %vm166, %v154, 0
    %173 = vmatprep.subr.mxu0 0.0
    %174 = vmatpush1.msra.mxu0 %v155
    %175 = vmatprep.subr.mxu0 0.0
    %176 = vmatpush1.msra.mxu0 %v156
    %177 = vmatprep.subr.mxu0 0.0
    %178 = vmatpush1.msra.mxu0 %v157
    %179 = vmatprep.subr.mxu0 0.0
    %180 = vmatpush1.msra.mxu0 %v158
    %181 = vmatprep.subr.mxu0 0.0
    %182 = vmatpush1.msra.mxu0 0.0
    %183 = vmatprep.subr.mxu0 0.0
    %184 = vmatpush1.msra.mxu0 0.0
    %185 = vmatprep.subr.mxu0 0.0
    %186 = vmatpush1.msra.mxu0 0.0
    %187 = vmatprep.subr.mxu0 0.0
    %188 = vmatpush1.msra.mxu0 0.0
    %189 = vmatprep.subr.mxu0 0.0
    %190 = vmatpush1.msra.mxu0 0.0
    %191 = vmatprep.subr.mxu0 0.0
    %192 = vmatpush1.msra.mxu0 0.0
    %193 = vmatprep.subr.mxu0 0.0
    %194 = vmatpush1.msra.mxu0 0.0
    %195 = vmatprep.subr.mxu0 0.0
    %196 = vmatpush1.msra.mxu0 0.0
    %197 = vmatprep.subr.mxu0 0.0
    %198 = vmatpush1.msra.mxu0 0.0
    %199 = vmatprep.subr.mxu0 0.0
    %200 = vmatpush1.msra.mxu0 0.0
    %201 = vmatprep.subr.mxu0 0.0
    %202 = vmatpush1.msra.mxu0 0.0
    %203 = vmatprep.subr.mxu0 0.0
    %204 = vmatpush1.msra.mxu0 0.0
    %205 = vmatprep.subr.mxu0 0.0
    %206 = vmatpush1.msra.mxu0 0.0
    %207 = vmatprep.subr.mxu0 0.0
    %208 = vmatpush1.msra.mxu0 0.0
    %209 = vmatprep.subr.mxu0 0.0
    %210 = vmatpush1.msra.mxu0 0.0
    %211 = vmatprep.subr.mxu0 0.0
    %212 = vmatpush1.msra.mxu0 0.0
    %213 = vmatprep.subr.mxu0 0.0
    %214 = vmatpush1.msra.mxu0 0.0
    %215 = vmatprep.subr.mxu0 0.0
    %216 = vmatpush1.msra.mxu0 0.0
    %217 = vmatprep.subr.mxu0 0.0
    %218 = vmatpush1.msra.mxu0 0.0
    %219 = vmatprep.subr.mxu0 0.0
    %220 = vmatpush1.msra.mxu0 0.0
    %221 = vmatprep.subr.mxu0 0.0
    %222 = vmatpush1.msra.mxu0 0.0
    %223 = vmatprep.subr.mxu0 0.0
    %224 = vmatpush1.msra.mxu0 0.0
    %225 = vmatprep.subr.mxu0 0.0
    %226 = vmatpush1.msra.mxu0 0.0
    %227 = vmatprep.subr.mxu0 0.0
    %228 = vmatpush1.msra.mxu0 0.0
    %229 = vmatprep.subr.mxu0 0.0
    %230 = vmatpush1.msra.mxu0 0.0
    %231 = vmatprep.subr.mxu0 0.0
    %232 = vmatpush1.msra.mxu0 0.0
    %233 = vmatprep.subr.mxu0 0.0
    %234 = vmatpush1.msra.mxu0 0.0
    %235 = vmatprep.subr.mxu0 0.0
    %236 = vmatpush1.msra.mxu0 0.0
    %237 = vmatprep.mubr.f32.mxu0 0.0
    %238 = vmatmul.mubr.f32.gmra.mrb[0].mxu0 %v168
    %v239 = vpop.f32.mrb[0].mxu0
    %v240 = vadd.f32 %v164, %v239
    %v241 = vpop.f32.mrb[0].mxu0
    %242 = vmatprep.mubr.f32.mxu0 0.0
    %243 = vmatmul.mubr.f32.gmra.mrb[0].mxu0 %v171
    %v244 = vpop.f32.mrb[0].mxu0
    %v245 = vadd.f32 %v164, %v244
    %v246 = vpop.f32.mrb[0].mxu0
    %247 = vdwg.mxu0
    %v248 = vadd.f32 %v240, %v153
    %v249 = vadd.f32 %v245, %v154
    %v250 = vmax.f32 %v248, 0.0
    %v251 = vmax.f32 %v249, 0.0
    %v252 = vld [vmem:[#allocation4] sm:$0xff]
    %v253 = vld [vmem:[#allocation4 + $0x8] sm:$0xff]
    %v254 = vld [vmem:[#allocation4 + $0x10] sm:$0xff]
    %v255 = vld [vmem:[#allocation4 + $0x18] sm:$0xff]
    %v256 = vld [vmem:[%s6] sm:$0x1]
    %v258 = vlaneseq
    %v259 = vshrl.u32 %v258, 7
    %v260 = vsub.s32 0, %v259
    %v261 = vrot.slane %v256, %v260
    %v264 = vsel %vm166, %v250, 0
    %v267 = vsel %vm166, %v251, 0
    %269 = vmatprep.subr.mxu0 0.0
    %270 = vmatpush1.msra.mxu0 %v252
    %271 = vmatprep.subr.mxu0 0.0
    %272 = vmatpush1.msra.mxu0 %v253
    %273 = vmatprep.subr.mxu0 0.0
    %274 = vmatpush1.msra.mxu0 %v254
    %275 = vmatprep.subr.mxu0 0.0
    %276 = vmatpush1.msra.mxu0 %v255
    %277 = vmatprep.subr.mxu0 0.0
    %278 = vmatpush1.msra.mxu0 0.0
    %279 = vmatprep.subr.mxu0 0.0
    %280 = vmatpush1.msra.mxu0 0.0
    %281 = vmatprep.subr.mxu0 0.0
    %282 = vmatpush1.msra.mxu0 0.0
    %283 = vmatprep.subr.mxu0 0.0
    %284 = vmatpush1.msra.mxu0 0.0
    %285 = vmatprep.subr.mxu0 0.0
    %286 = vmatpush1.msra.mxu0 0.0
    %287 = vmatprep.subr.mxu0 0.0
    %288 = vmatpush1.msra.mxu0 0.0
    %289 = vmatprep.subr.mxu0 0.0
    %290 = vmatpush1.msra.mxu0 0.0
    %291 = vmatprep.subr.mxu0 0.0
    %292 = vmatpush1.msra.mxu0 0.0
    %293 = vmatprep.subr.mxu0 0.0
    %294 = vmatpush1.msra.mxu0 0.0
    %295 = vmatprep.subr.mxu0 0.0
    %296 = vmatpush1.msra.mxu0 0.0
    %297 = vmatprep.subr.mxu0 0.0
    %298 = vmatpush1.msra.mxu0 0.0
    %299 = vmatprep.subr.mxu0 0.0
    %300 = vmatpush1.msra.mxu0 0.0
    %301 = vmatprep.subr.mxu0 0.0
    %302 = vmatpush1.msra.mxu0 0.0
    %303 = vmatprep.subr.mxu0 0.0
    %304 = vmatpush1.msra.mxu0 0.0
    %305 = vmatprep.subr.mxu0 0.0
    %306 = vmatpush1.msra.mxu0 0.0
    %307 = vmatprep.subr.mxu0 0.0
    %308 = vmatpush1.msra.mxu0 0.0
    %309 = vmatprep.subr.mxu0 0.0
    %310 = vmatpush1.msra.mxu0 0.0
    %311 = vmatprep.subr.mxu0 0.0
    %312 = vmatpush1.msra.mxu0 0.0
    %313 = vmatprep.subr.mxu0 0.0
    %314 = vmatpush1.msra.mxu0 0.0
    %315 = vmatprep.subr.mxu0 0.0
    %316 = vmatpush1.msra.mxu0 0.0
    %317 = vmatprep.subr.mxu0 0.0
    %318 = vmatpush1.msra.mxu0 0.0
    %319 = vmatprep.subr.mxu0 0.0
    %320 = vmatpush1.msra.mxu0 0.0
    %321 = vmatprep.subr.mxu0 0.0
    %322 = vmatpush1.msra.mxu0 0.0
    %323 = vmatprep.subr.mxu0 0.0
    %324 = vmatpush1.msra.mxu0 0.0
    %325 = vmatprep.subr.mxu0 0.0
    %326 = vmatpush1.msra.mxu0 0.0
    %327 = vmatprep.subr.mxu0 0.0
    %328 = vmatpush1.msra.mxu0 0.0
    %329 = vmatprep.subr.mxu0 0.0
    %330 = vmatpush1.msra.mxu0 0.0
    %331 = vmatprep.subr.mxu0 0.0
    %332 = vmatpush1.msra.mxu0 0.0
    %333 = vmatprep.mubr.f32.mxu0 0.0
    %334 = vmatmul.mubr.f32.gmra.mrb[0].mxu0 %v264
    %v335 = vpop.f32.mrb[0].mxu0
    %v336 = vadd.f32 %v261, %v335
    %v337 = vpop.f32.mrb[0].mxu0
    %338 = vmatprep.mubr.f32.mxu0 0.0
    %339 = vmatmul.mubr.f32.gmra.mrb[0].mxu0 %v267
    %v340 = vpop.f32.mrb[0].mxu0
    %v341 = vadd.f32 %v261, %v340
    %v342 = vpop.f32.mrb[0].mxu0
    %343 = vdwg.mxu0
    %v344 = vadd.f32 %v336, %v250
    %v345 = vadd.f32 %v341, %v251
    %v346 = vmax.f32 %v344, 0.0
    %v347 = vmax.f32 %v345, 0.0
    %v348 = vld [vmem:[%s7] sm:$0xff]
    %v349 = vld [vmem:[%s7 + $0x8] sm:$0xff]
    %v350 = vld [vmem:[%s7 + $0x10] sm:$0xff]
    %v351 = vld [vmem:[%s7 + $0x18] sm:$0xff]
    %v352 = vld [vmem:[%s8] sm:$0x1]
    %v354 = vlaneseq
    %v355 = vshrl.u32 %v354, 7
    %v356 = vsub.s32 0, %v355
    %v357 = vrot.slane %v352, %v356
    %v360 = vsel %vm166, %v346, 0
    %v363 = vsel %vm166, %v347, 0
    %365 = vmatprep.subr.mxu0 0.0
    %366 = vmatpush1.msra.mxu0 %v348
    %367 = vmatprep.subr.mxu0 0.0
    %368 = vmatpush1.msra.mxu0 %v349
    %369 = vmatprep.subr.mxu0 0.0
    %370 = vmatpush1.msra.mxu0 %v350
    %371 = vmatprep.subr.mxu0 0.0
    %372 = vmatpush1.msra.mxu0 %v351
    %373 = vmatprep.subr.mxu0 0.0
    %374 = vmatpush1.msra.mxu0 0.0
    %375 = vmatprep.subr.mxu0 0.0
    %376 = vmatpush1.msra.mxu0 0.0
    %377 = vmatprep.subr.mxu0 0.0
    %378 = vmatpush1.msra.mxu0 0.0
    %379 = vmatprep.subr.mxu0 0.0
    %380 = vmatpush1.msra.mxu0 0.0
    %381 = vmatprep.subr.mxu0 0.0
    %382 = vmatpush1.msra.mxu0 0.0
    %383 = vmatprep.subr.mxu0 0.0
    %384 = vmatpush1.msra.mxu0 0.0
    %385 = vmatprep.subr.mxu0 0.0
    %386 = vmatpush1.msra.mxu0 0.0
    %387 = vmatprep.subr.mxu0 0.0
    %388 = vmatpush1.msra.mxu0 0.0
    %389 = vmatprep.subr.mxu0 0.0
    %390 = vmatpush1.msra.mxu0 0.0
    %391 = vmatprep.subr.mxu0 0.0
    %392 = vmatpush1.msra.mxu0 0.0
    %393 = vmatprep.subr.mxu0 0.0
    %394 = vmatpush1.msra.mxu0 0.0
    %395 = vmatprep.subr.mxu0 0.0
    %396 = vmatpush1.msra.mxu0 0.0
    %397 = vmatprep.subr.mxu0 0.0
    %398 = vmatpush1.msra.mxu0 0.0
    %399 = vmatprep.subr.mxu0 0.0
    %400 = vmatpush1.msra.mxu0 0.0
    %401 = vmatprep.subr.mxu0 0.0
    %402 = vmatpush1.msra.mxu0 0.0
    %403 = vmatprep.subr.mxu0 0.0
    %404 = vmatpush1.msra.mxu0 0.0
    %405 = vmatprep.subr.mxu0 0.0
    %406 = vmatpush1.msra.mxu0 0.0
    %407 = vmatprep.subr.mxu0 0.0
    %408 = vmatpush1.msra.mxu0 0.0
    %409 = vmatprep.subr.mxu0 0.0
    %410 = vmatpush1.msra.mxu0 0.0
    %411 = vmatprep.subr.mxu0 0.0
    %412 = vmatpush1.msra.mxu0 0.0
    %413 = vmatprep.subr.mxu0 0.0
    %414 = vmatpush1.msra.mxu0 0.0
    %415 = vmatprep.subr.mxu0 0.0
    %416 = vmatpush1.msra.mxu0 0.0
    %417 = vmatprep.subr.mxu0 0.0
    %418 = vmatpush1.msra.mxu0 0.0
    %419 = vmatprep.subr.mxu0 0.0
    %420 = vmatpush1.msra.mxu0 0.0
    %421 = vmatprep.subr.mxu0 0.0
    %422 = vmatpush1.msra.mxu0 0.0
    %423 = vmatprep.subr.mxu0 0.0
    %424 = vmatpush1.msra.mxu0 0.0
    %425 = vmatprep.subr.mxu0 0.0
    %426 = vmatpush1.msra.mxu0 0.0
    %427 = vmatprep.subr.mxu0 0.0
    %428 = vmatpush1.msra.mxu0 0.0
    %429 = vmatprep.mubr.f32.mxu0 0.0
    %430 = vmatmul.mubr.f32.gmra.mrb[0].mxu0 %v360
    %v431 = vpop.f32.mrb[0].mxu0
    %v432 = vadd.f32 %v357, %v431
    %v433 = vpop.f32.mrb[0].mxu0
    %434 = vmatprep.mubr.f32.mxu0 0.0
    %435 = vmatmul.mubr.f32.gmra.mrb[0].mxu0 %v363
    %v436 = vpop.f32.mrb[0].mxu0
    %v437 = vadd.f32 %v357, %v436
    %v438 = vpop.f32.mrb[0].mxu0
    %439 = vdwg.mxu0
    %vm440 = vcmask 64512
    %441 = vst.msk [vmem:[%s9] sm:$0xff] %vm440, %v432
    %442 = vst.msk [vmem:[%s9 + $0x8] sm:$0xff] %vm440, %v437
    // Predicated region
    $region46: #{_decoder_forward_impl.1} parent=1 // pred_check
      _
    $region47: #{_decoder_forward_impl.1} parent=1 // pred_check_branch
      %444 = sbr.rel (0) target = $region49
    $region48: #{_decoder_forward_impl.1} parent=1 // pred_region
      _
    $region49: #{_decoder_forward_impl.1} parent=1 // pred_fallthru
      _
    // Predicated region
    $region50: #{_decoder_forward_impl.1} parent=1 // pred_check
      _
    $region51: #{_decoder_forward_impl.1} parent=1 // pred_check_branch
      %446 = sbr.rel (0) target = $region53
    $region52: #{_decoder_forward_impl.1} parent=1 // pred_region
      _
    $region53: #{_decoder_forward_impl.1} parent=1 // pred_fallthru
      _
    %447 = vsyncpa [#allocation3], 1
    %448 = vsyncpa [#allocation5], 1

</llo_original>
